<compile_context>
chip_gen: v6e
topology: v6e:2x2x1
jax: 0.10.0
libtpu: 0.0.40
codegen_flags: <defaults>
</compile_context>

<pallas_src>
import jax
import jax.numpy as jnp
from jax.experimental import pallas as pl
from jax.experimental.pallas import tpu as pltpu

_LANE = 128              # lane width (last dim of a vreg)
_MAX_TM = 8192           # hard cap on the row tile
_VMEM_BUDGET = 24 << 20  # bytes allowed for double-buffered input/output streams
_VMEM_LIMIT = 32 << 20   # scoped-VMEM limit (safe on v5e/v6e/v7x physical VMEM)
_MIN_GRID_STEPS = 8      # aim for >= 8 grid steps so megacore/pipelining can engage


def _round_up(a, b):
    return (a + b - 1) // b * b


def _sublanes(dtype) -> int:
    """Sublane granularity of a vreg tile for this dtype (packed along sublanes)."""
    return max(8, 32 // jnp.dtype(dtype).itemsize)


def _mul_kernel(x_ref, y_ref, o_ref):
    # Cast to the output dtype inside the kernel: the kernel is DMA/store bound,
    # so the VPU cast is free and the wrapper never runs a separate astype pass.
    o_ref[...] = x_ref[...].astype(o_ref.dtype) * y_ref[...].astype(o_ref.dtype)


def multiplicative_integration_gate(x, y):
    """Elementwise x * y via a lane-dense, row-tiled Pallas kernel."""
    assert x.shape == y.shape, "x and y must have the same shape"
    out_dtype = jnp.result_type(x.dtype, y.dtype)
    orig_shape = x.shape
    n = x.size
    if n == 0:
        return jnp.zeros(orig_shape, out_dtype)

    xb = jnp.dtype(x.dtype).itemsize
    yb = jnp.dtype(y.dtype).itemsize
    ob = jnp.dtype(out_dtype).itemsize
    sub = max(_sublanes(x.dtype), _sublanes(y.dtype), _sublanes(out_dtype))

    rows = pl.cdiv(n, _LANE)
    fast = (n % _LANE == 0) and (rows % sub == 0)

    if fast:
        # Divisible case: pure (free) reshapes, inputs kept in native dtypes.
        rows_p = rows
        xf = x.reshape(rows_p, _LANE)
        yf = y.reshape(rows_p, _LANE)
    else:
        # Ragged case: pad only to the next sublane-aligned row (< sub*128 elems).
        rows_p = _round_up(rows, sub)
        pad = rows_p * _LANE - n
        xf = jnp.pad(x.reshape(-1), (0, pad)).reshape(rows_p, _LANE)
        yf = jnp.pad(y.reshape(-1), (0, pad)).reshape(rows_p, _LANE)

    # Row tile: as big as the VMEM budget allows (double-buffered x/y/out streams),
    # capped at _MAX_TM, but small enough to keep >= _MIN_GRID_STEPS grid steps
    # for medium inputs so the parallel axis can split across TensorCores.
    bytes_per_row = _LANE * (xb + yb + ob)
    tm_cap = max(sub, min(_MAX_TM, (_VMEM_BUDGET // (2 * bytes_per_row)) // sub * sub))
    tm = min(tm_cap, max(sub, _round_up(pl.cdiv(rows_p, _MIN_GRID_STEPS), sub)))

    grid = (pl.cdiv(rows_p, tm),)  # partial last block handled by Pallas

    out = pl.pallas_call(
        _mul_kernel,
        out_shape=jax.ShapeDtypeStruct((rows_p, _LANE), out_dtype),
        grid=grid,
        in_specs=[
            pl.BlockSpec((tm, _LANE), lambda i: (i, 0)),
            pl.BlockSpec((tm, _LANE), lambda i: (i, 0)),
        ],
        out_specs=pl.BlockSpec((tm, _LANE), lambda i: (i, 0)),
        compiler_params=pltpu.CompilerParams(
            dimension_semantics=("parallel",),
            vmem_limit_bytes=_VMEM_LIMIT,
        ),
        cost_estimate=pl.CostEstimate(
            flops=rows_p * _LANE,
            transcendentals=0,
            bytes_accessed=rows_p * bytes_per_row,
        ),
    )(xf, yf)

    if fast:
        return out.reshape(orig_shape)
    return out.reshape(-1)[:n].reshape(orig_shape)


if __name__ == "__main__":
    key = jax.random.PRNGKey(0)
    k_x, k_y, k_a, k_b, k_c, k_d, k_e, k_f = jax.random.split(key, 8)

    # Shape consistent with the module's usage (gate over hidden states).
    batch, seq, hidden = 2, 8, 32
    x = jax.random.normal(k_x, (batch, seq, hidden), dtype=jnp.float32)
    y = jax.random.normal(k_y, (batch, seq, hidden), dtype=jnp.float32)
    out = multiplicative_integration_gate(x, y)
    jax.block_until_ready(out)
    ref = x * y
    assert out.shape == ref.shape
    assert jnp.allclose(out, ref, atol=1e-6, rtol=1e-6), "mismatch vs reference"

    # Ragged size (not a multiple of 128) exercises the pad / slice path.
    a = jax.random.normal(k_a, (3, 7, 5), dtype=jnp.float32)
    b = jax.random.normal(k_b, (3, 7, 5), dtype=jnp.float32)
    out2 = multiplicative_integration_gate(a, b)
    jax.block_until_ready(out2)
    assert jnp.allclose(out2, a * b, atol=1e-6, rtol=1e-6), "ragged mismatch"

    # Divisible size exercises the zero-copy fast path and a multi-step grid.
    c = jax.random.normal(k_c, (4, 256, 512), dtype=jnp.float32)
    d = jax.random.normal(k_d, (4, 256, 512), dtype=jnp.float32)
    out3 = multiplicative_integration_gate(c, d)
    jax.block_until_ready(out3)
    assert jnp.allclose(out3, c * d, atol=1e-6, rtol=1e-6), "fast-path mismatch"

    # Mixed dtype exercises the in-kernel promotion (bf16 * f32 -> f32).
    e = jax.random.normal(k_e, (8, 32, 64), dtype=jnp.bfloat16)
    f = jax.random.normal(k_f, (8, 32, 64), dtype=jnp.float32)
    out4 = multiplicative_integration_gate(e, f)
    jax.block_until_ready(out4)
    assert out4.dtype == jnp.float32
    assert jnp.allclose(out4, e * f, atol=1e-6, rtol=1e-6), "mixed-dtype mismatch"

    print("KERNEL_OK")
</pallas_src>

<mosaic_0001>
module attributes {stable_mosaic.version = 11 : i64} {
  func.func @_mul_kernel(%arg0: i32, %arg1: memref<8x128xf32, #tpu.memory_space<vmem>>, %arg2: memref<8x128xf32, #tpu.memory_space<vmem>>, %arg3: memref<8x128xf32, #tpu.memory_space<vmem>>) attributes {dimension_semantics = [#tpu.dimension_semantics<parallel>], iteration_bounds = array<i64: 1>, scalar_prefetch = 0 : i64, scratch_operands = 0 : i64, tpu.core_type = #tpu.core_type<tc>, window_params = [{transform_indices = @transform_0, window_bounds = array<i64: 8, 128>}, {transform_indices = @transform_1, window_bounds = array<i64: 8, 128>}, {transform_indices = @transform_2, window_bounds = array<i64: 8, 128>}]} {
    %c0 = arith.constant 0 : index
    %c0_0 = arith.constant 0 : index
    %0 = vector.load %arg1[%c0, %c0_0] : memref<8x128xf32, #tpu.memory_space<vmem>>, vector<8x128xf32>
    %c0_1 = arith.constant 0 : index
    %c0_2 = arith.constant 0 : index
    %1 = vector.load %arg2[%c0_1, %c0_2] : memref<8x128xf32, #tpu.memory_space<vmem>>, vector<8x128xf32>
    %2 = arith.mulf %0, %1 : vector<8x128xf32>
    %c0_3 = arith.constant 0 : index
    %c0_4 = arith.constant 0 : index
    %3 = vector.load %arg3[%c0_3, %c0_4] : memref<8x128xf32, #tpu.memory_space<vmem>>, vector<8x128xf32>
    tpu.vector_store %arg3[%c0_3, %c0_4], %2 {strides = array<i32>} : memref<8x128xf32, #tpu.memory_space<vmem>>, vector<8x128xf32>,
    return
  }
  func.func @transform_0(%arg0: i32) -> (i32, i32) {
    %c0_i32 = arith.constant 0 : i32
    %c0_i32_0 = arith.constant 0 : i32
    return %arg0, %c0_i32 : i32, i32
  }
  func.func @transform_1(%arg0: i32) -> (i32, i32) {
    %c0_i32 = arith.constant 0 : i32
    %c0_i32_0 = arith.constant 0 : i32
    return %arg0, %c0_i32 : i32, i32
  }
  func.func @transform_2(%arg0: i32) -> (i32, i32) {
    %c0_i32 = arith.constant 0 : i32
    %c0_i32_0 = arith.constant 0 : i32
    return %arg0, %c0_i32 : i32, i32
  }
}

</mosaic_0001>

<llo_original>
// kernel: tpu_custom_call.1
$region0: #{tpu_custom_call.1}
  #allocation0 [shape = 'u32[]', space=smem, size = 0x4, offset = 0x4, fixed_abs, tag = 'smem constant byte address 0x4 - core index']
  #allocation1 [shape = 'u32[144,128]{1,0:T(1,128)}', space=vmem, size = 0x12000, scoped, tag = 'internal scratch']
  %s0 = inlined_call_operand.hbm [shape: f32[8,128], index: 0, kind: input, shape index: {}]
  %s1 = inlined_call_operand.hbm [shape: f32[8,128], index: 1, kind: input, shape index: {}]
  %s2 = inlined_call_operand.hbm [shape: f32[8,128], index: 2, kind: output, shape index: {}]
  %s3 = sld [smem:[#allocation0]]
  $region26: #{tpu_custom_call.1} parent=0
    _
  %s5 = ssub.s32 1, %s3
  %s6 = scalar_select 0, %s5, %s3
  $region1: #{tpu_custom_call.1} parent=0
    #allocation2 [shape = 'u8[4096]{0}', space=vmem, size = 0x1000, scoped, tag = 'input window, operand 0, single buffered']
    #allocation3 [shape = 's32[1]{0}', space=sflag, size = 0x4, scoped, tag = 'scoped memory for tpu_custom_call.1']
    #allocation4 [shape = 's32[1]{0}', space=sflag, size = 0x4, scoped, tag = 'scoped memory for tpu_custom_call.1']
    #allocation5 [shape = 'u8[4096]{0}', space=vmem, size = 0x1000, scoped, tag = 'input window, operand 1, single buffered']
    #allocation6 [shape = 's32[1]{0}', space=sflag, size = 0x4, scoped, tag = 'scoped memory for tpu_custom_call.1']
    #allocation7 [shape = 'u8[4096]{0}', space=vmem, size = 0x1000, scoped, tag = 'output window, operand 0, single buffered']
    %7 = vsyncpa [#allocation3], 0
    %8 = vsyncpa [#allocation6], 0
    %9 = vsyncpa [#allocation4], 0
    // Predicated region
    $region2: #{tpu_custom_call.1} parent=1 // pred_check
      _
    $region3: #{tpu_custom_call.1} parent=1 // pred_check_branch
      %11 = sbr.rel (0) target = $region5
    $region4: #{tpu_custom_call.1} parent=1 // pred_region
      %s13 = ssub.s32 128, 128
      %14 = vsyncadd [#allocation3], %s13
      %s16 = sshll.u32 [#allocation2], 4
      %s17 = int_to_ptr.vmem [resolvable:$true] %s16
      %19 = dma.hbm_to_vmem [thread:$0]  %s0, 128, %s17, [#allocation3]
    $region5: #{tpu_custom_call.1} parent=1 // pred_fallthru
      _
    // Predicated region
    $region6: #{tpu_custom_call.1} parent=1 // pred_check
      _
    $region7: #{tpu_custom_call.1} parent=1 // pred_check_branch
      %21 = sbr.rel (0) target = $region9
    $region8: #{tpu_custom_call.1} parent=1 // pred_region
      %s23 = ssub.s32 128, 128
      %24 = vsyncadd [#allocation6], %s23
      %s26 = sshll.u32 [#allocation5], 4
      %s27 = int_to_ptr.vmem [resolvable:$true] %s26
      %29 = dma.hbm_to_vmem [thread:$0]  %s1, 128, %s27, [#allocation6]
    $region9: #{tpu_custom_call.1} parent=1 // pred_fallthru
      _
    // Predicated region
    $region10: #{tpu_custom_call.1} parent=1 // pred_check
      _
    $region11: #{tpu_custom_call.1} parent=1 // pred_check_branch
      %31 = sbr.rel (0) target = $region13
    $region12: #{tpu_custom_call.1} parent=1 // pred_region
      %32 = dma.done [#allocation3], 128
    $region13: #{tpu_custom_call.1} parent=1 // pred_fallthru
      _
    // Predicated region
    $region14: #{tpu_custom_call.1} parent=1 // pred_check
      _
    $region15: #{tpu_custom_call.1} parent=1 // pred_check_branch
      %34 = sbr.rel (0) target = $region17
    $region16: #{tpu_custom_call.1} parent=1 // pred_region
      %35 = dma.done [#allocation6], 128
    $region17: #{tpu_custom_call.1} parent=1 // pred_fallthru
      _
    %v36 = vld [vmem:[#allocation2] sm:$0xff]
    %v37 = vld [vmem:[#allocation5] sm:$0xff]
    %v38 = vmul.f32 %v36, %v37
    %39 = vst [vmem:[#allocation7] sm:$0xff] %v38
    // Predicated region
    $region18: #{tpu_custom_call.1} parent=1 // pred_check
      _
    $region19: #{tpu_custom_call.1} parent=1 // pred_check_branch
      %41 = sbr.rel (0) target = $region21
    $region20: #{tpu_custom_call.1} parent=1 // pred_region
      %s43 = ssub.s32 128, 128
      %44 = vsyncadd [#allocation4], %s43
      %s46 = sshll.u32 [#allocation7], 4
      %s47 = int_to_ptr.vmem [resolvable:$true] %s46
      %49 = dma.vmem_to_hbm [thread:$0]  %s47, 128, %s2, [#allocation4]
    $region21: #{tpu_custom_call.1} parent=1 // pred_fallthru
      _
    // Predicated region
    $region22: #{tpu_custom_call.1} parent=1 // pred_check
      _
    $region23: #{tpu_custom_call.1} parent=1 // pred_check_branch
      %51 = sbr.rel (0) target = $region25
    $region24: #{tpu_custom_call.1} parent=1 // pred_region
      %52 = dma.done [#allocation4], 128
    $region25: #{tpu_custom_call.1} parent=1 // pred_fallthru
      _
    %53 = vsyncpa [#allocation3], 1
    %54 = vsyncpa [#allocation6], 1
    %55 = vsyncpa [#allocation4], 1

</llo_original>
